<compile_context>
chip_gen: v6e
topology: v6e:2x2x1
jax: 0.10.0
libtpu: 0.0.40
codegen_flags: <defaults>
</compile_context>

<pallas_src>
import jax
import jax.numpy as jnp
from jax.experimental import pallas as pl
from jax.experimental.pallas import tpu as pltpu


def _round_up(x, m):
    return (x + m - 1) // m * m


def _choose_block_n(n):
    """Balanced, lane-aligned batch tiles: <= 8192 lanes, >= 2 (even #) tiles."""
    cap = 8192                                   # per-step overhead plateau; ~2-3 MiB VMEM
    tiles = max(2, -(-n // cap))                 # >= 2 tiles so v7x megacore gets both TCs
    tiles += tiles % 2                           # even tile count -> balanced core split
    return min(cap, _round_up(-(-n // tiles), 128))


def _mlp_kernel(xa_ref, w1a_ref, w2t_ref, b2_ref, out_ref):
    # xa_ref : [k_in,  block_n]  lifted activation block [x^T ; 1], batch on lanes
    # w1a_ref: [h_dim, k_in   ]  [W1^T | b1]  (layer-1 weights with bias folded in)
    # w2t_ref: [d_out, h_dim  ]
    # b2_ref : [d_out, 1      ]
    # out_ref: [d_out, block_n]  lane-dense store
    #
    # Layer 1 (+ bias, via the constant-1 row of xa) on the MXU; only the ReLU
    # stays on the VPU.  Default matmul precision is fine at h_dim=32 / O(1)
    # inputs; request lax.Precision.HIGHEST here if h_dim or input scale grows.
    h = jnp.maximum(
        jnp.dot(w1a_ref[...], xa_ref[...], preferred_element_type=jnp.float32),
        0.0)                                                    # [h_dim, block_n]
    # Layer 2 on the MXU; tiny +b2 epilogue on the VPU; lane-dense store.
    out_ref[...] = (
        jnp.dot(w2t_ref[...], h, preferred_element_type=jnp.float32)
        + b2_ref[...])


def pack_params(w1, b1, w2, b2):
    """Pack params once: W1a = [W1^T | b1], W2^T, b2 as a column."""
    d_in, h_dim = w1.shape
    d_out = w2.shape[1]
    w1a = jnp.concatenate(
        [w1.astype(jnp.float32).T, b1.astype(jnp.float32).reshape(h_dim, 1)],
        axis=1)                                                 # [h_dim, d_in+1]
    w2t = w2.astype(jnp.float32).T                              # [d_out, h_dim]
    b2c = b2.astype(jnp.float32).reshape(d_out, 1)              # [d_out, 1]
    return w1a, w2t, b2c


def mi_classifier_forward_t(xa, w1a, w2t, b2c, *, block_n=None, input_buffers=None):
    """Transposed fast path: no wrapper-side layout passes.

    xa : [d_in+1, N] f32, the lifted activation (features on rows, batch on
         columns, last row == 1.0).
    Returns logits_t : [2, N] f32.
    """
    k_in, n = xa.shape
    h_dim = w1a.shape[0]
    d_out = w2t.shape[0]
    assert w1a.shape[1] == k_in, "w1a must be [h_dim, d_in+1] matching xa rows"

    if block_n is None:
        block_n = _choose_block_n(max(n, 1))
    else:
        block_n = _round_up(block_n, 128)
    n_pad = _round_up(max(n, 1), block_n)

    xa = xa.astype(jnp.float32)
    if n_pad != n:
        xa = jnp.pad(xa, ((0, 0), (0, n_pad - n)))   # zero cols -> out = b2, sliced off

    if input_buffers is None:
        xa_spec = pl.BlockSpec((k_in, block_n), lambda i: (0, i))
    else:
        # Deeper input pipeline (useful on v5e if input DMA is exposed).
        xa_spec = pl.BlockSpec((k_in, block_n), lambda i: (0, i),
                               pipeline_mode=pl.Buffered(input_buffers))

    out_t = pl.pallas_call(
        _mlp_kernel,
        out_shape=jax.ShapeDtypeStruct((d_out, n_pad), jnp.float32),
        grid_spec=pltpu.PrefetchScalarGridSpec(
            num_scalar_prefetch=0,
            grid=(n_pad // block_n,),
            in_specs=[
                xa_spec,                                        # batch-tiled activations
                pl.BlockSpec((h_dim, k_in), lambda i: (0, 0)),  # params: same block every
                pl.BlockSpec((d_out, h_dim), lambda i: (0, 0)), # step -> no re-DMA
                pl.BlockSpec((d_out, 1), lambda i: (0, 0)),
            ],
            out_specs=pl.BlockSpec((d_out, block_n), lambda i: (0, i)),
        ),
        compiler_params=pltpu.CompilerParams(
            # Parallel grid axis -> megacore sharding on v7x (no-op on v5e/v6e).
            dimension_semantics=("parallel",),
        ),
    )(xa, w1a, w2t, b2c)

    if n_pad != n:
        out_t = out_t[:, :n]
    return out_t


def mi_classifier_forward(xy, w1, b1, w2, b2, *, block_n=None, input_buffers=None):
    """logits = relu(xy @ w1 + b1) @ w2 + b2, matching MIClassifier.forward.

    Presents the PyTorch [N, x_dim+1] -> [N, 2] interface; the lift/transpose on
    input and transpose on output each cost an extra HBM pass.  For repeated
    high-throughput use, keep data transposed and call mi_classifier_forward_t
    with pre-packed params instead.
    """
    n = xy.shape[0]
    w1a, w2t, b2c = pack_params(w1, b1, w2, b2)
    # Lifted, transposed activation [x^T ; 1] built in one pass.
    xa = jnp.concatenate(
        [xy.astype(jnp.float32).T, jnp.ones((1, n), jnp.float32)], axis=0)
    out_t = mi_classifier_forward_t(xa, w1a, w2t, b2c,
                                    block_n=block_n, input_buffers=input_buffers)
    return out_t.T                                              # back to [N, 2]


def init_params(key, x_dim=1, h_dim=32):
    """Deterministic init mimicking PyTorch nn.Linear default (U[-1/sqrt(fan_in), +])."""
    d_in = x_dim + 1
    k1, k2, k3, k4 = jax.random.split(key, 4)
    bound1 = 1.0 / jnp.sqrt(jnp.float32(d_in))
    bound2 = 1.0 / jnp.sqrt(jnp.float32(h_dim))
    w1 = jax.random.uniform(k1, (d_in, h_dim), jnp.float32, -bound1, bound1)
    b1 = jax.random.uniform(k2, (h_dim,), jnp.float32, -bound1, bound1)
    w2 = jax.random.uniform(k3, (h_dim, 2), jnp.float32, -bound2, bound2)
    b2 = jax.random.uniform(k4, (2,), jnp.float32, -bound2, bound2)
    return w1, b1, w2, b2


if __name__ == "__main__":
    key = jax.random.PRNGKey(0)
    k_params, k_x = jax.random.split(key)

    x_dim, h_dim, batch = 1, 32, 300   # batch not a multiple of 128 -> pad path
    w1, b1, w2, b2 = init_params(k_params, x_dim=x_dim, h_dim=h_dim)
    xy = jax.random.normal(k_x, (batch, x_dim + 1), jnp.float32)

    # Default sizing: balanced tiles, >= 2 grid steps (v7x megacore path).
    logits = jax.block_until_ready(mi_classifier_forward(xy, w1, b1, w2, b2))
    # Explicit small tile: exercises the multi-step parallel grid path.
    logits_tiled = jax.block_until_ready(
        mi_classifier_forward(xy, w1, b1, w2, b2, block_n=128))
    # Transposed fast path: pre-packed params + lifted input, no wrapper transposes.
    w1a, w2t, b2c = pack_params(w1, b1, w2, b2)
    xa_fast = jnp.concatenate(
        [xy.T, jnp.ones((1, batch), jnp.float32)], axis=0)      # [d_in+1, N]
    logits_t = jax.block_until_ready(
        mi_classifier_forward_t(xa_fast, w1a, w2t, b2c))

    # Reference check in plain JAX (same math as the PyTorch forward).
    hi = jnp.maximum(jnp.dot(xy, w1, precision=jax.lax.Precision.HIGHEST) + b1, 0.0)
    ref = jnp.dot(hi, w2, precision=jax.lax.Precision.HIGHEST) + b2

    assert logits.shape == (batch, 2)
    assert logits_tiled.shape == (batch, 2)
    assert logits_t.shape == (2, batch)
    assert jnp.allclose(logits, ref, atol=1e-4, rtol=1e-4)
    assert jnp.allclose(logits_tiled, ref, atol=1e-4, rtol=1e-4)
    assert jnp.allclose(logits_t.T, ref, atol=1e-4, rtol=1e-4)

    print("KERNEL_OK")
</pallas_src>

<mosaic_0001>
module attributes {stable_mosaic.version = 11 : i64} {
  func.func @_mlp_kernel(%arg0: i32, %arg1: memref<3x256xf32, #tpu.memory_space<vmem>>, %arg2: memref<32x3xf32, #tpu.memory_space<vmem>>, %arg3: memref<2x32xf32, #tpu.memory_space<vmem>>, %arg4: memref<2x1xf32, #tpu.memory_space<vmem>>, %arg5: memref<2x256xf32, #tpu.memory_space<vmem>>) attributes {dimension_semantics = [#tpu.dimension_semantics<parallel>], iteration_bounds = array<i64: 2>, scalar_prefetch = 0 : i64, scratch_operands = 0 : i64, tpu.core_type = #tpu.core_type<tc>, window_params = [{transform_indices = @transform_0, window_bounds = array<i64: 3, 256>}, {pipeline_mode = #tpu.pipeline_mode<synchronous>, transform_indices = @transform_1, window_bounds = array<i64: 32, 3>}, {pipeline_mode = #tpu.pipeline_mode<synchronous>, transform_indices = @transform_2, window_bounds = array<i64: 2, 32>}, {pipeline_mode = #tpu.pipeline_mode<synchronous>, transform_indices = @transform_3, window_bounds = array<i64: 2, 1>}, {transform_indices = @transform_4, window_bounds = array<i64: 2, 256>}]} {
    %c0 = arith.constant 0 : index
    %c0_0 = arith.constant 0 : index
    %0 = vector.load %arg2[%c0, %c0_0] : memref<32x3xf32, #tpu.memory_space<vmem>>, vector<32x3xf32>
    %c0_1 = arith.constant 0 : index
    %c0_2 = arith.constant 0 : index
    %1 = vector.load %arg1[%c0_1, %c0_2] : memref<3x256xf32, #tpu.memory_space<vmem>>, vector<3x256xf32>
    %cst = arith.constant dense<0.000000e+00> : vector<32x256xf32>
    %2 = tpu.matmul %0, %1, %cst {dimension_numbers = #tpu.dot_dimension_numbers<[1], [0], [0], [1], [0, 0, 1, 1], [], []>} : vector<32x3xf32>, vector<3x256xf32>, vector<32x256xf32> -> vector<32x256xf32>
    %cst_3 = arith.constant 0.000000e+00 : f32
    %3 = vector.broadcast %cst_3 : f32 to vector<32x256xf32>
    %4 = arith.maximumf %2, %3 : vector<32x256xf32>
    %c0_4 = arith.constant 0 : index
    %c0_5 = arith.constant 0 : index
    %5 = vector.load %arg3[%c0_4, %c0_5] : memref<2x32xf32, #tpu.memory_space<vmem>>, vector<2x32xf32>
    %cst_6 = arith.constant dense<0.000000e+00> : vector<2x256xf32>
    %6 = tpu.matmul %5, %4, %cst_6 {dimension_numbers = #tpu.dot_dimension_numbers<[1], [0], [0], [1], [0, 0, 1, 1], [], []>} : vector<2x32xf32>, vector<32x256xf32>, vector<2x256xf32> -> vector<2x256xf32>
    %c0_7 = arith.constant 0 : index
    %c0_8 = arith.constant 0 : index
    %7 = vector.load %arg4[%c0_7, %c0_8] : memref<2x1xf32, #tpu.memory_space<vmem>>, vector<2x1xf32>
    %8 = vector.broadcast %7 : vector<2x1xf32> to vector<2x256xf32>
    %9 = arith.addf %6, %8 : vector<2x256xf32>
    %c0_9 = arith.constant 0 : index
    %c0_10 = arith.constant 0 : index
    %10 = vector.load %arg5[%c0_9, %c0_10] : memref<2x256xf32, #tpu.memory_space<vmem>>, vector<2x256xf32>
    tpu.vector_store %arg5[%c0_9, %c0_10], %9 {strides = array<i32>} : memref<2x256xf32, #tpu.memory_space<vmem>>, vector<2x256xf32>,
    return
  }
  func.func @transform_0(%arg0: i32) -> (i32, i32) {
    %c0_i32 = arith.constant 0 : i32
    %c0_i32_0 = arith.constant 0 : i32
    return %c0_i32, %arg0 : i32, i32
  }
  func.func @transform_1(%arg0: i32) -> (i32, i32) {
    %c0_i32 = arith.constant 0 : i32
    %c0_i32_0 = arith.constant 0 : i32
    %c0_i32_1 = arith.constant 0 : i32
    return %c0_i32, %c0_i32_0 : i32, i32
  }
  func.func @transform_2(%arg0: i32) -> (i32, i32) {
    %c0_i32 = arith.constant 0 : i32
    %c0_i32_0 = arith.constant 0 : i32
    %c0_i32_1 = arith.constant 0 : i32
    return %c0_i32, %c0_i32_0 : i32, i32
  }
  func.func @transform_3(%arg0: i32) -> (i32, i32) {
    %c0_i32 = arith.constant 0 : i32
    %c0_i32_0 = arith.constant 0 : i32
    %c0_i32_1 = arith.constant 0 : i32
    return %c0_i32, %c0_i32_0 : i32, i32
  }
  func.func @transform_4(%arg0: i32) -> (i32, i32) {
    %c0_i32 = arith.constant 0 : i32
    %c0_i32_0 = arith.constant 0 : i32
    return %c0_i32, %arg0 : i32, i32
  }
}

</mosaic_0001>

<llo_original>
// kernel: tpu_custom_call.1
$region0: #{tpu_custom_call.1}
  #allocation0 [shape = 'u32[]', space=smem, size = 0x4, offset = 0x4, fixed_abs, tag = 'smem constant byte address 0x4 - core index']
  #allocation1 [shape = 'u32[144,128]{1,0:T(1,128)}', space=vmem, size = 0x12000, scoped, tag = 'internal scratch']
  %s0 = inlined_call_operand.vmem [shape: f32[3,512], index: 0, kind: input, shape index: {}]
  %s1 = inlined_call_operand.vmem [shape: f32[32,3], index: 1, kind: input, shape index: {}]
  %s2 = inlined_call_operand.vmem [shape: f32[2,32], index: 2, kind: input, shape index: {}]
  %s3 = inlined_call_operand.vmem [shape: f32[2,1], index: 3, kind: input, shape index: {}]
  %s4 = inlined_call_operand.hbm [shape: f32[2,512], index: 4, kind: output, shape index: {}]
  %s5 = sld [smem:[#allocation0]]
  $region49: #{tpu_custom_call.1} parent=0
    _
  %s7 = ssub.s32 1, %s5
  %s8 = scalar_select 0, %s7, %s5
  $region1: #{tpu_custom_call.1} parent=0
    #allocation2 [shape = 'u8[4096]{0}', space=vmem, size = 0x1000, scoped, tag = 'output window, operand 0']
    #allocation3 [shape = 's32[2]{0}', space=sflag, size = 0x8, scoped, tag = 'scoped memory for tpu_custom_call.1']
    %9 = vsyncpa [#allocation3], 0
    %s10 = scalar_lea.sflag [#allocation3], 1
    %11 = vsyncpa %s10, 0
    loop: start=0, step=1, limit=4
    $region2: #{tpu_custom_call.1} parent=1 // loop_pre_header
      _
    $region3: #{tpu_custom_call.1} parent=1 // loop_header
      %s13 = sphi 0, %s17
      %p14 = scmp.ge.s32.totalorder %s13, 4
      %s23 = sphi 0, %s25
      %s26 = sphi 0, %s23
      %s27 = sphi 0, %s26
      %s43 = sphi 0, %s27
      %s47 = sphi 0, %s47
      %s49 = sphi 0, %s47
      %s50 = sphi 0, %s49
      %s64 = sphi 0, %s50
      %s68 = sphi 0, %s68
      %s70 = sphi 0, %s68
      %s71 = sphi 0, %s70
      %s85 = sphi 0, %s71
      %s89 = sphi 0, %s89
      %s91 = sphi 0, %s89
      %s92 = sphi 0, %s91
      %s106 = sphi 0, %s92
      %s112 = sphi 0, %s114
      %s115 = sphi 0, %s112
      %s116 = sphi 0, %s115
      %s132 = sphi 0, %s116
    $region4: #{tpu_custom_call.1} parent=1 // loop_header_branch
      %16 = sbr.rel (%p14) target = $region8
    $region5: #{tpu_custom_call.1} parent=1 // loop_body
      %s18 = ssub.s32 %s13, 1
      %s19 = ssub.s32 %s13, 2
      %s20 = sadd.s32 %s13, 1
      %s21 = ssub.s32 %s13, %s20
      %p22 = scmp.eq.s32.totalorder %s21, 0
      %s24 = sadd.s32 %s23, 1
      %s25 = scalar_select %p22, %s23, %s24
      %p28 = pneg %p22
      %p29 = scmp.eq.s32.totalorder %s13, 1
      %p30 = por %p28, %p29
      %p31 = scmp.ne.s32.totalorder %s23, %s26
      %p32 = scmp.eq.s32.totalorder %s13, 0
      %p33 = por %p31, %p32
      %p34 = scmp.ne.s32.totalorder %s23, %s26
      %p35 = scmp.eq.s32.totalorder %s18, 1
      %p36 = por %p34, %p35
      %p37 = scmp.ne.s32.totalorder %s26, %s27
      %p38 = scmp.eq.s32.totalorder %s18, 0
      %p39 = por %p37, %p38
      %p40 = scmp.ne.s32.totalorder %s26, %s27
      %p41 = scmp.eq.s32.totalorder %s19, 1
      %p42 = por %p40, %p41
      %p44 = scmp.ne.s32.totalorder %s27, %s43
      %p45 = scmp.eq.s32.totalorder %s19, 0
      %p46 = por %p44, %p45
      %s48 = sadd.s32 %s47, 1
      %p51 = scmp.eq.s32.totalorder %s13, 1
      %p52 = scmp.ne.s32.totalorder %s47, %s49
      %p53 = scmp.eq.s32.totalorder %s13, 0
      %p54 = por %p52, %p53
      %p55 = scmp.ne.s32.totalorder %s47, %s49
      %p56 = scmp.eq.s32.totalorder %s18, 1
      %p57 = por %p55, %p56
      %p58 = scmp.ne.s32.totalorder %s49, %s50
      %p59 = scmp.eq.s32.totalorder %s18, 0
      %p60 = por %p58, %p59
      %p61 = scmp.ne.s32.totalorder %s49, %s50
      %p62 = scmp.eq.s32.totalorder %s19, 1
      %p63 = por %p61, %p62
      %p65 = scmp.ne.s32.totalorder %s50, %s64
      %p66 = scmp.eq.s32.totalorder %s19, 0
      %p67 = por %p65, %p66
      %s69 = sadd.s32 %s68, 1
      %p72 = scmp.eq.s32.totalorder %s13, 1
      %p73 = scmp.ne.s32.totalorder %s68, %s70
      %p74 = scmp.eq.s32.totalorder %s13, 0
      %p75 = por %p73, %p74
      %p76 = scmp.ne.s32.totalorder %s68, %s70
      %p77 = scmp.eq.s32.totalorder %s18, 1
      %p78 = por %p76, %p77
      %p79 = scmp.ne.s32.totalorder %s70, %s71
      %p80 = scmp.eq.s32.totalorder %s18, 0
      %p81 = por %p79, %p80
      %p82 = scmp.ne.s32.totalorder %s70, %s71
      %p83 = scmp.eq.s32.totalorder %s19, 1
      %p84 = por %p82, %p83
      %p86 = scmp.ne.s32.totalorder %s71, %s85
      %p87 = scmp.eq.s32.totalorder %s19, 0
      %p88 = por %p86, %p87
      %s90 = sadd.s32 %s89, 1
      %p93 = scmp.eq.s32.totalorder %s13, 1
      %p94 = scmp.ne.s32.totalorder %s89, %s91
      %p95 = scmp.eq.s32.totalorder %s13, 0
      %p96 = por %p94, %p95
      %p97 = scmp.ne.s32.totalorder %s89, %s91
      %p98 = scmp.eq.s32.totalorder %s18, 1
      %p99 = por %p97, %p98
      %p100 = scmp.ne.s32.totalorder %s91, %s92
      %p101 = scmp.eq.s32.totalorder %s18, 0
      %p102 = por %p100, %p101
      %p103 = scmp.ne.s32.totalorder %s91, %s92
      %p104 = scmp.eq.s32.totalorder %s19, 1
      %p105 = por %p103, %p104
      %p107 = scmp.ne.s32.totalorder %s92, %s106
      %p108 = scmp.eq.s32.totalorder %s19, 0
      %p109 = por %p107, %p108
      %s110 = ssub.s32 %s13, %s20
      %p111 = scmp.eq.s32.totalorder %s110, 0
      %s113 = sadd.s32 %s112, 1
      %s114 = scalar_select %p111, %s112, %s113
      %p117 = pneg %p111
      %p118 = scmp.eq.s32.totalorder %s13, 1
      %p119 = por %p117, %p118
      %p120 = scmp.ne.s32.totalorder %s112, %s115
      %p121 = scmp.eq.s32.totalorder %s13, 0
      %p122 = por %p120, %p121
      %p123 = scmp.ne.s32.totalorder %s112, %s115
      %p124 = scmp.eq.s32.totalorder %s18, 1
      %p125 = por %p123, %p124
      %p126 = scmp.ne.s32.totalorder %s115, %s116
      %p127 = scmp.eq.s32.totalorder %s18, 0
      %p128 = por %p126, %p127
      %p129 = scmp.ne.s32.totalorder %s115, %s116
      %p130 = scmp.eq.s32.totalorder %s19, 1
      %p131 = por %p129, %p130
      %p133 = scmp.ne.s32.totalorder %s116, %s132
      %p134 = scmp.eq.s32.totalorder %s19, 0
      %p135 = por %p133, %p134
      %p136 = scmp.le.s32.totalorder 1, %s13
      %p137 = scmp.lt.s32.totalorder %s13, 3
      %p138 = pnand %p136, %p137
      %p139 = pneg %p138
      // Predicated region
      $region9: #{tpu_custom_call.1} parent=5 // pred_check
        _
      $region10: #{tpu_custom_call.1} parent=5 // pred_check_branch
        %141 = sbr.rel (%p138) target = $region12
      $region11: #{tpu_custom_call.1} parent=5 // pred_region
        %s142 = ssub.s32 %s13, 1
        // Predicated region
        $region13: #{tpu_custom_call.1} parent=11 // pred_check
          %p143 = pneg %p60
        $region14: #{tpu_custom_call.1} parent=11 // pred_check_branch
          %145 = sbr.rel (%p143) target = $region16
        $region15: #{tpu_custom_call.1} parent=11 // pred_region
          _
        $region16: #{tpu_custom_call.1} parent=11 // pred_fallthru
          _
        // Predicated region
        $region17: #{tpu_custom_call.1} parent=11 // pred_check
          %p146 = pneg %p81
        $region18: #{tpu_custom_call.1} parent=11 // pred_check_branch
          %148 = sbr.rel (%p146) target = $region20
        $region19: #{tpu_custom_call.1} parent=11 // pred_region
          _
        $region20: #{tpu_custom_call.1} parent=11 // pred_fallthru
          _
        // Predicated region
        $region21: #{tpu_custom_call.1} parent=11 // pred_check
          %p149 = pneg %p102
        $region22: #{tpu_custom_call.1} parent=11 // pred_check_branch
          %151 = sbr.rel (%p149) target = $region24
        $region23: #{tpu_custom_call.1} parent=11 // pred_region
          _
        $region24: #{tpu_custom_call.1} parent=11 // pred_fallthru
          _
      $region12: #{tpu_custom_call.1} parent=5 // pred_fallthru
        _
      %p152 = scmp.lt.s32.totalorder %s13, 2
      // Predicated region
      $region25: #{tpu_custom_call.1} parent=5 // pred_check
        %p153 = pneg %p152
      $region26: #{tpu_custom_call.1} parent=5 // pred_check_branch
        %155 = sbr.rel (%p153) target = $region28
      $region27: #{tpu_custom_call.1} parent=5 // pred_region
        // Predicated region
        $region29: #{tpu_custom_call.1} parent=27 // pred_check
          %p156 = pneg %p33
        $region30: #{tpu_custom_call.1} parent=27 // pred_check_branch
          %158 = sbr.rel (%p156) target = $region32
        $region31: #{tpu_custom_call.1} parent=27 // pred_region
          %s159 = smul.u32 2, %s13
          %p160 = scmp.lt.s32.totalorder %s159, 3
          %s161 = scalar_select %p160, %s159, 3
          %s162 = smul.addr %s161, 4
          %s163 = scalar_lea.vmem %s0, %s162
          %s164 = smul.u32 2, %s13
        $region32: #{tpu_custom_call.1} parent=27 // pred_fallthru
          _
      $region28: #{tpu_custom_call.1} parent=5 // pred_fallthru
        _
      %p165 = scmp.le.s32.totalorder 1, %s13
      %p166 = scmp.lt.s32.totalorder %s13, 3
      %p167 = pnand %p165, %p166
      %p168 = pneg %p167
      // Predicated region
      $region33: #{tpu_custom_call.1} parent=5 // pred_check
        _
      $region34: #{tpu_custom_call.1} parent=5 // pred_check_branch
        %170 = sbr.rel (%p167) target = $region36
      $region35: #{tpu_custom_call.1} parent=5 // pred_region
        %s171 = ssub.s32 %s13, 1
        %s172 = smul.u32 2, %s18
        %p173 = scmp.lt.s32.totalorder %s172, 3
        %s174 = scalar_select %p173, %s172, 3
        %s175 = smul.addr %s174, 4
        %s176 = scalar_lea.vmem %s0, %s175
        %p177 = pneg %p39
        %p178 = pneg %p36
        %p179 = pneg %p60
        %p180 = pneg %p57
        %p181 = pneg %p81
        %p182 = pneg %p78
        %p183 = pneg %p102
        %p184 = pneg %p99
        %p185 = pneg %p128
        %p186 = pneg %p125
        %s187 = sand.u32 %s115, 1
        %s188 = scalar_lea.sflag [#allocation3], %s187
        %s189 = sand.u32 %s115, 1
        %s190 = smul.addr %s189, 4
        %s191 = scalar_lea.vmem [#allocation2], %s190
        %s192 = smul.u32 2, %s18
        %p193 = scmp.lt.s32.totalorder %s192, 3
        %s194 = scalar_select %p193, %s192, 3
        %s195 = smul.addr %s194, 4
        %s196 = scalar_lea.vmem %s0, %s195
        %s197 = smul.u32 2, %s18
        %s198 = smul.u32 2, %s18
        %v199 = vld [vmem:[%s1] sm:$0xff]
        %v200 = vld [vmem:[%s1 + $0x8] sm:$0xff]
        %v201 = vld [vmem:[%s1 + $0x10] sm:$0xff]
        %v202 = vld [vmem:[%s1 + $0x18] sm:$0xff]
        %v203 = vld [vmem:[%s196] sm:$0x77]
        %v205 = vcombine.high %v203, %v203
        %vm206 = vcmask 23552
        %v208 = vsel %vm206, %v199, 0
        %v211 = vsel %vm206, %v200, 0
        %v214 = vsel %vm206, %v201, 0
        %v217 = vsel %vm206, %v202, 0
        %vm219 = vcmask 1042432
        %v220 = vsel %vm219, %v203, 0
        %v222 = vsel %vm219, %v205, 0
        %224 = vmatprep.subr.mxu0 0.0
        %225 = vmatpush1.msra.mxu0 0.0
        %226 = vmatprep.subr.mxu0 0.0
        %227 = vmatpush1.msra.mxu0 0.0
        %228 = vmatprep.subr.mxu0 0.0
        %229 = vmatpush1.msra.mxu0 0.0
        %230 = vmatprep.subr.mxu0 0.0
        %231 = vmatpush1.msra.mxu0 0.0
        %232 = vmatprep.subr.mxu0 0.0
        %233 = vmatpush1.msra.mxu0 0.0
        %234 = vmatprep.subr.mxu0 0.0
        %235 = vmatpush1.msra.mxu0 0.0
        %236 = vmatprep.subr.mxu0 0.0
        %237 = vmatpush1.msra.mxu0 0.0
        %238 = vmatprep.subr.mxu0 0.0
        %239 = vmatpush1.msra.mxu0 0.0
        %240 = vmatprep.subr.mxu0 0.0
        %241 = vmatpush1.msra.mxu0 0.0
        %242 = vmatprep.subr.mxu0 0.0
        %243 = vmatpush1.msra.mxu0 0.0
        %244 = vmatprep.subr.mxu0 0.0
        %245 = vmatpush1.msra.mxu0 0.0
        %246 = vmatprep.subr.mxu0 0.0
        %247 = vmatpush1.msra.mxu0 0.0
        %248 = vmatprep.subr.mxu0 0.0
        %249 = vmatpush1.msra.mxu0 0.0
        %250 = vmatprep.subr.mxu0 0.0
        %251 = vmatpush1.msra.mxu0 0.0
        %252 = vmatprep.subr.mxu0 0.0
        %253 = vmatpush1.msra.mxu0 0.0
        %254 = vmatprep.subr.mxu0 %v222
        %255 = vmatpush1.msra.mxu0 %v220
        %256 = vmatprep.subr.mxu0 0.0
        %257 = vmatpush2.msra.mxu0 0.0
        %258 = vmatprep.subr.mxu0 0.0
        %259 = vmatpush2.msra.mxu0 0.0
        %260 = vmatprep.subr.mxu0 0.0
        %261 = vmatpush2.msra.mxu0 0.0
        %262 = vmatprep.subr.mxu0 0.0
        %263 = vmatpush2.msra.mxu0 0.0
        %264 = vmatprep.subr.mxu0 0.0
        %265 = vmatpush2.msra.mxu0 0.0
        %266 = vmatprep.subr.mxu0 0.0
        %267 = vmatpush2.msra.mxu0 0.0
        %268 = vmatprep.subr.mxu0 0.0
        %269 = vmatpush2.msra.mxu0 0.0
        %270 = vmatprep.subr.mxu0 0.0
        %271 = vmatpush2.msra.mxu0 0.0
        %272 = vmatprep.subr.mxu0 0.0
        %273 = vmatpush2.msra.mxu0 0.0
        %274 = vmatprep.subr.mxu0 0.0
        %275 = vmatpush2.msra.mxu0 0.0
        %276 = vmatprep.subr.mxu0 0.0
        %277 = vmatpush2.msra.mxu0 0.0
        %278 = vmatprep.subr.mxu0 0.0
        %279 = vmatpush2.msra.mxu0 0.0
        %280 = vmatprep.subr.mxu0 0.0
        %281 = vmatpush2.msra.mxu0 0.0
        %282 = vmatprep.subr.mxu0 0.0
        %283 = vmatpush2.msra.mxu0 0.0
        %284 = vmatprep.subr.mxu0 0.0
        %285 = vmatpush2.msra.mxu0 0.0
        %286 = vmatprep.subr.mxu0 0.0
        %287 = vmatpush2.msra.mxu0 0.0
        %288 = vmatprep.mubr.f32.mxu0 0.0
        %289 = vmatmul.mubr.f32.gmra.mxu0 %v208
        %v290 = vpop.f32.mrf.mxu0
        %v291 = vadd.f32 0.0, %v290
        %v292 = vpop.f32.mrf.mxu0
        %v293 = vadd.f32 0.0, %v292
        %294 = vmatprep.mubr.f32.mxu0 0.0
        %295 = vmatmul.mubr.f32.gmra.mxu0 %v211
        %v296 = vpop.f32.mrf.mxu0
        %v297 = vadd.f32 0.0, %v296
        %v298 = vpop.f32.mrf.mxu0
        %v299 = vadd.f32 0.0, %v298
        %300 = vmatprep.mubr.f32.mxu0 0.0
        %301 = vmatmul.mubr.f32.gmra.mxu0 %v214
        %v302 = vpop.f32.mrf.mxu0
        %v303 = vadd.f32 0.0, %v302
        %v304 = vpop.f32.mrf.mxu0
        %v305 = vadd.f32 0.0, %v304
        %306 = vmatprep.mubr.f32.mxu0 0.0
        %307 = vmatmul.mubr.f32.gmra.mxu0 %v217
        %v308 = vpop.f32.mrf.mxu0
        %v309 = vadd.f32 0.0, %v308
        %v310 = vpop.f32.mrf.mxu0
        %v311 = vadd.f32 0.0, %v310
        %312 = vdwg.mxu0
        %v313 = vmax.f32 %v291, 0.0
        %v314 = vmax.f32 %v293, 0.0
        %v315 = vmax.f32 %v297, 0.0
        %v316 = vmax.f32 %v299, 0.0
        %v317 = vmax.f32 %v303, 0.0
        %v318 = vmax.f32 %v305, 0.0
        %v319 = vmax.f32 %v309, 0.0
        %v320 = vmax.f32 %v311, 0.0
        %v321 = vld [vmem:[%s2] sm:$0x3]
        %v322 = vld [vmem:[%s3] sm:$0x3]
        %324 = vset.pattern.permute.xlu0 0
        %325 = vperm.xlu0 %324, %v322
        %v326 = vpop.permute.xlu0 %325
        %vm328 = vcmask 261120
        %v330 = vsel %vm328, %v321, 0
        %332 = vmatprep.subr.mxu0 0.0
        %333 = vmatpush1.msra.mxu0 0.0
        %334 = vmatprep.subr.mxu0 0.0
        %335 = vmatpush1.msra.mxu0 0.0
        %336 = vmatprep.subr.mxu0 0.0
        %337 = vmatpush1.msra.mxu0 0.0
        %338 = vmatprep.subr.mxu0 0.0
        %339 = vmatpush1.msra.mxu0 0.0
        %340 = vmatprep.subr.mxu0 0.0
        %341 = vmatpush1.msra.mxu0 0.0
        %342 = vmatprep.subr.mxu0 0.0
        %343 = vmatpush1.msra.mxu0 0.0
        %344 = vmatprep.subr.mxu0 0.0
        %345 = vmatpush1.msra.mxu0 0.0
        %346 = vmatprep.subr.mxu0 0.0
        %347 = vmatpush1.msra.mxu0 0.0
        %348 = vmatprep.subr.mxu0 0.0
        %349 = vmatpush1.msra.mxu0 0.0
        %350 = vmatprep.subr.mxu0 0.0
        %351 = vmatpush1.msra.mxu0 0.0
        %352 = vmatprep.subr.mxu0 0.0
        %353 = vmatpush1.msra.mxu0 0.0
        %354 = vmatprep.subr.mxu0 0.0
        %355 = vmatpush1.msra.mxu0 0.0
        %356 = vmatprep.subr.mxu0 %v320
        %357 = vmatpush1.msra.mxu0 %v319
        %358 = vmatprep.subr.mxu0 %v318
        %359 = vmatpush1.msra.mxu0 %v317
        %360 = vmatprep.subr.mxu0 %v316
        %361 = vmatpush1.msra.mxu0 %v315
        %362 = vmatprep.subr.mxu0 %v314
        %363 = vmatpush1.msra.mxu0 %v313
        %364 = vmatprep.subr.mxu0 0.0
        %365 = vmatpush2.msra.mxu0 0.0
        %366 = vmatprep.subr.mxu0 0.0
        %367 = vmatpush2.msra.mxu0 0.0
        %368 = vmatprep.subr.mxu0 0.0
        %369 = vmatpush2.msra.mxu0 0.0
        %370 = vmatprep.subr.mxu0 0.0
        %371 = vmatpush2.msra.mxu0 0.0
        %372 = vmatprep.subr.mxu0 0.0
        %373 = vmatpush2.msra.mxu0 0.0
        %374 = vmatprep.subr.mxu0 0.0
        %375 = vmatpush2.msra.mxu0 0.0
        %376 = vmatprep.subr.mxu0 0.0
        %377 = vmatpush2.msra.mxu0 0.0
        %378 = vmatprep.subr.mxu0 0.0
        %379 = vmatpush2.msra.mxu0 0.0
        %380 = vmatprep.subr.mxu0 0.0
        %381 = vmatpush2.msra.mxu0 0.0
        %382 = vmatprep.subr.mxu0 0.0
        %383 = vmatpush2.msra.mxu0 0.0
        %384 = vmatprep.subr.mxu0 0.0
        %385 = vmatpush2.msra.mxu0 0.0
        %386 = vmatprep.subr.mxu0 0.0
        %387 = vmatpush2.msra.mxu0 0.0
        %388 = vmatprep.subr.mxu0 0.0
        %389 = vmatpush2.msra.mxu0 0.0
        %390 = vmatprep.subr.mxu0 0.0
        %391 = vmatpush2.msra.mxu0 0.0
        %392 = vmatprep.subr.mxu0 0.0
        %393 = vmatpush2.msra.mxu0 0.0
        %394 = vmatprep.subr.mxu0 0.0
        %395 = vmatpush2.msra.mxu0 0.0
        %396 = vmatprep.mubr.f32.mxu0 0.0
        %397 = vmatmul.mubr.f32.gmra.mxu0 %v330
        %v398 = vpop.f32.mrf.mxu0
        %v399 = vadd.f32 %v326, %v398
        %v400 = vpop.f32.mrf.mxu0
        %v401 = vadd.f32 %v326, %v400
        %402 = vdwg.mxu0
        %v405 = vcombine.low %v399, %v401
        %v407 = vunpack.c.l.s4 1983009808
        %v408 = vunpack.c.0.s8 %v407
        %v409 = vlaneseq
        %v410 = vshrl.u32 %v409, 7
        %v411 = vsub.s32 %v408, %v410
        %v412 = vrot.slane %v405, %v411
        %414 = vst [vmem:[%s191] sm:$0xf] %v412
        %s415 = sand.u32 %s115, 1
        %s416 = scalar_lea.sflag [#allocation3], %s415
        %s417 = sand.u32 %s115, 1
        %s418 = smul.addr %s417, 4
        %s419 = scalar_lea.vmem [#allocation2], %s418
        // Predicated region
        $region37: #{tpu_custom_call.1} parent=35 // pred_check
          %p420 = pneg %p125
        $region38: #{tpu_custom_call.1} parent=35 // pred_check_branch
          %422 = sbr.rel (%p420) target = $region40
        $region39: #{tpu_custom_call.1} parent=35 // pred_region
          %s423 = smul.u32 2, %s18
          %s425 = ssub.s32 64, 64
          %426 = vsyncadd %s416, %s425
          %s427 = smul.addr %s423, 32
          %s428 = scalar_lea.hbm %s4, %s427
          %s430 = sshll.u32 %s419, 4
          %s431 = int_to_ptr.vmem [resolvable:$true] %s430
          %433 = dma.vmem_to_hbm [thread:$0]  %s431, 64, %s428, %s416
        $region40: #{tpu_custom_call.1} parent=35 // pred_fallthru
          _
      $region36: #{tpu_custom_call.1} parent=5 // pred_fallthru
        _
      %p434 = scmp.le.s32.totalorder 2, %s13
      // Predicated region
      $region41: #{tpu_custom_call.1} parent=5 // pred_check
        %p435 = pneg %p434
      $region42: #{tpu_custom_call.1} parent=5 // pred_check_branch
        %437 = sbr.rel (%p435) target = $region44
      $region43: #{tpu_custom_call.1} parent=5 // pred_region
        %s438 = ssub.s32 %s13, 2
        // Predicated region
        $region45: #{tpu_custom_call.1} parent=43 // pred_check
          %p439 = pneg %p131
        $region46: #{tpu_custom_call.1} parent=43 // pred_check_branch
          %441 = sbr.rel (%p439) target = $region48
        $region47: #{tpu_custom_call.1} parent=43 // pred_region
          %s442 = sand.u32 %s116, 1
          %s443 = scalar_lea.sflag [#allocation3], %s442
          %s444 = sand.u32 %s116, 1
          %s445 = smul.addr %s444, 4
          %s446 = scalar_lea.vmem [#allocation2], %s445
          %447 = dma.done %s443, 64
        $region48: #{tpu_custom_call.1} parent=43 // pred_fallthru
          _
      $region44: #{tpu_custom_call.1} parent=5 // pred_fallthru
        _
    $region6: #{tpu_custom_call.1} parent=1 // loop_footer
      %s17 = sadd.s32 1, %s13
    $region7: #{tpu_custom_call.1} parent=1 // loop_footer_branch
      %12 = sbr.rel target = $region3
    $region8: #{tpu_custom_call.1} parent=1 // loop_exit
      _
    %448 = vsyncpa [#allocation3], 1
    %s449 = scalar_lea.sflag [#allocation3], 1
    %450 = vsyncpa %s449, 1

</llo_original>
